<compile_context>
chip_gen: v7x
topology: tpu7x:2x2x1
jax: 0.10.0
libtpu: 0.0.40
codegen_flags: <defaults>
</compile_context>

<pallas_src>
import jax
import jax.numpy as jnp
from jax.experimental import pallas as pl
from jax.experimental.pallas import tpu as pltpu


def discrete_decoder_kernel(emb_ref, w_ref, b_ref, out_ref):
    # Linear: z = emb @ W_t + b.  W_t is the [D, N] pre-transposed weight, so this is a
    # canonical [M,K]x[K,N] MXU feed with no in-kernel transpose.
    z = jnp.dot(emb_ref[...], w_ref[...], preferred_element_type=jnp.float32)
    z = z + b_ref[...]  # b_ref is (1, N), broadcasts over the batch rows

    # Categorical(logits=z): normalized logits = z - logsumexp(z, -1, keepdims)
    m = jnp.max(z, axis=-1, keepdims=True)
    shifted = z - m
    e = jnp.exp(shifted)                       # single EUP exp, reused below
    s = jnp.sum(e, axis=-1, keepdims=True)
    norm_logits = shifted - jnp.log(s)
    probs = e / s                              # reuse e; exact divide keeps 1e-5 tol

    # Single packed output buffer: [0] = normalized logits, [1] = probs.
    out_ref[0] = norm_logits.astype(out_ref.dtype)
    out_ref[1] = probs.astype(out_ref.dtype)


def discrete_decoder(emb, weight_t, bias2d, *, block_b=128):
    """emb: [B, D] f32, weight_t: [D, N] f32 (pre-transposed once at init from PyTorch's
    [N, D] Linear layout), bias2d: [1, N] f32 (prepared once at init).

    Returns a packed [2, B, N] f32 array: out[0] = normalized logits
    (logits - logsumexp), out[1] = probs (softmax) -- the tensors
    torch.distributions.Categorical(logits=Linear(emb)) materializes.
    """
    B, D = emb.shape
    N = weight_t.shape[1]

    cost = pl.CostEstimate(
        flops=2 * B * D * N + 6 * B * N,          # matmul + softmax elementwise
        transcendentals=B * N + B,                # exp(shifted) + log(s)
        bytes_accessed=4 * (B * D + D * N + N + 2 * B * N),
    )
    out_shape = jax.ShapeDtypeStruct((2, B, N), jnp.float32)

    if B <= block_b or B % block_b != 0:
        # Tiny / irregular batch: single ungridded call, full arrays resident in VMEM.
        # No pipeline prologue/epilogue, no double-buffering -- this path is 100%
        # launch + input-DMA latency on every TPU generation at these sizes.
        return pl.pallas_call(
            discrete_decoder_kernel,
            out_shape=out_shape,
            in_specs=[
                pl.BlockSpec(memory_space=pltpu.MemorySpace.VMEM),
                pl.BlockSpec(memory_space=pltpu.MemorySpace.VMEM),
                pl.BlockSpec(memory_space=pltpu.MemorySpace.VMEM),
            ],
            out_specs=pl.BlockSpec(memory_space=pltpu.MemorySpace.VMEM),
            cost_estimate=cost,
        )(emb, weight_t, bias2d)

    # Batched path: 1-D parallel grid over the batch so the matmul/stores amortize the
    # launch and both v7x TensorCores (megacore) can be used. Weight/bias blocks are the
    # full (tiny) arrays and stay resident across grid steps.
    return pl.pallas_call(
        discrete_decoder_kernel,
        out_shape=out_shape,
        grid_spec=pltpu.PrefetchScalarGridSpec(
            num_scalar_prefetch=0,
            grid=(B // block_b,),
            in_specs=[
                pl.BlockSpec((block_b, D), lambda i: (i, 0)),
                pl.BlockSpec((D, N), lambda i: (0, 0)),
                pl.BlockSpec((1, N), lambda i: (0, 0)),
            ],
            out_specs=pl.BlockSpec((2, block_b, N), lambda i: (0, i, 0)),
        ),
        compiler_params=pltpu.CompilerParams(
            dimension_semantics=("parallel",),
        ),
        cost_estimate=cost,
    )(emb, weight_t, bias2d)


def _reference(emb, weight, bias):
    z = emb @ weight.T + bias
    logits = z - jax.nn.logsumexp(z, axis=-1, keepdims=True)
    probs = jax.nn.softmax(z, axis=-1)
    return logits, probs


if __name__ == "__main__":
    # Shapes implied by the module: emb [batch, embed_dim], space.n logits.
    B, EMBED_DIM, N_ACTIONS = 8, 32, 16

    key = jax.random.PRNGKey(0)
    k_emb, k_w, k_b, k_emb_big = jax.random.split(key, 4)

    emb = jax.random.normal(k_emb, (B, EMBED_DIM), dtype=jnp.float32)

    # Deterministic parameter init matching nn.Linear's default:
    # U(-1/sqrt(fan_in), 1/sqrt(fan_in)) for both weight and bias.
    bound = 1.0 / jnp.sqrt(jnp.float32(EMBED_DIM))
    weight = jax.random.uniform(k_w, (N_ACTIONS, EMBED_DIM),
                                minval=-bound, maxval=bound, dtype=jnp.float32)
    bias = jax.random.uniform(k_b, (N_ACTIONS,),
                              minval=-bound, maxval=bound, dtype=jnp.float32)

    # One-time parameter prep (init-time, NOT per call):
    weight_t = weight.T.copy()            # [D, N] canonical MXU layout
    bias2d = bias.reshape(1, N_ACTIONS)   # [1, N] row vector

    # --- small-batch (ungridded) path ---
    packed = discrete_decoder(emb, weight_t, bias2d)
    jax.block_until_ready(packed)
    logits, probs = packed[0], packed[1]

    logits_ref, probs_ref = _reference(emb, weight, bias)
    assert jnp.allclose(logits, logits_ref, atol=1e-5, rtol=1e-5)
    assert jnp.allclose(probs, probs_ref, atol=1e-5, rtol=1e-5)
    assert jnp.allclose(jnp.sum(probs, axis=-1), 1.0, atol=1e-5)

    # --- batched (parallel-grid) path ---
    B_BIG = 256
    emb_big = jax.random.normal(k_emb_big, (B_BIG, EMBED_DIM), dtype=jnp.float32)
    packed_big = discrete_decoder(emb_big, weight_t, bias2d, block_b=128)
    jax.block_until_ready(packed_big)
    logits_b, probs_b = packed_big[0], packed_big[1]

    logits_bref, probs_bref = _reference(emb_big, weight, bias)
    assert jnp.allclose(logits_b, logits_bref, atol=1e-5, rtol=1e-5)
    assert jnp.allclose(probs_b, probs_bref, atol=1e-5, rtol=1e-5)
    assert jnp.allclose(jnp.sum(probs_b, axis=-1), 1.0, atol=1e-5)

    print("KERNEL_OK")
</pallas_src>

<mosaic_0001>
module attributes {stable_mosaic.version = 11 : i64} {
  func.func @discrete_decoder_kernel(%arg0: memref<8x32xf32, #tpu.memory_space<vmem>>, %arg1: memref<32x16xf32, #tpu.memory_space<vmem>>, %arg2: memref<1x16xf32, #tpu.memory_space<vmem>>, %arg3: memref<2x8x16xf32, #tpu.memory_space<vmem>>) attributes {dimension_semantics = [], scalar_prefetch = 0 : i64, scratch_operands = 0 : i64, tpu.core_type = #tpu.core_type<tc>} {
    %c0 = arith.constant 0 : index
    %c0_0 = arith.constant 0 : index
    %0 = vector.load %arg0[%c0, %c0_0] : memref<8x32xf32, #tpu.memory_space<vmem>>, vector<8x32xf32>
    %c0_1 = arith.constant 0 : index
    %c0_2 = arith.constant 0 : index
    %1 = vector.load %arg1[%c0_1, %c0_2] : memref<32x16xf32, #tpu.memory_space<vmem>>, vector<32x16xf32>
    %cst = arith.constant dense<0.000000e+00> : vector<8x16xf32>
    %2 = tpu.matmul %0, %1, %cst {dimension_numbers = #tpu.dot_dimension_numbers<[1], [0], [0], [1], [0, 0, 1, 1], [], []>} : vector<8x32xf32>, vector<32x16xf32>, vector<8x16xf32> -> vector<8x16xf32>
    %c0_3 = arith.constant 0 : index
    %c0_4 = arith.constant 0 : index
    %3 = vector.load %arg2[%c0_3, %c0_4] : memref<1x16xf32, #tpu.memory_space<vmem>>, vector<1x16xf32>
    %4 = vector.broadcast %3 : vector<1x16xf32> to vector<8x16xf32>
    %5 = arith.addf %2, %4 : vector<8x16xf32>
    %cst_5 = arith.constant dense<0xFF800000> : vector<8xf32>
    %6 = vector.multi_reduction <maximumf>, %5, %cst_5 [1] : vector<8x16xf32> to vector<8xf32>
    %7 = vector.shape_cast %6 : vector<8xf32> to vector<8x1xf32>
    %8 = vector.broadcast %7 : vector<8x1xf32> to vector<8x16xf32>
    %9 = arith.subf %5, %8 : vector<8x16xf32>
    %10 = math.exp %9 : vector<8x16xf32>
    %cst_6 = arith.constant dense<0.000000e+00> : vector<8xf32>
    %11 = vector.multi_reduction <add>, %10, %cst_6 [1] : vector<8x16xf32> to vector<8xf32>
    %12 = vector.shape_cast %11 : vector<8xf32> to vector<8x1xf32>
    %13 = math.log %12 : vector<8x1xf32>
    %14 = vector.broadcast %13 : vector<8x1xf32> to vector<8x16xf32>
    %15 = arith.subf %9, %14 : vector<8x16xf32>
    %16 = vector.broadcast %12 : vector<8x1xf32> to vector<8x16xf32>
    %17 = arith.divf %10, %16 : vector<8x16xf32>
    %c0_7 = arith.constant 0 : index
    %c0_8 = arith.constant 0 : index
    %c0_9 = arith.constant 0 : index
    %18 = vector.load %arg3[%c0_7, %c0_8, %c0_9] : memref<2x8x16xf32, #tpu.memory_space<vmem>>, vector<1x8x16xf32>
    %19 = vector.shape_cast %18 : vector<1x8x16xf32> to vector<8x16xf32>
    %20 = vector.shape_cast %15 : vector<8x16xf32> to vector<1x8x16xf32>
    tpu.vector_store %arg3[%c0_7, %c0_8, %c0_9], %20 {strides = array<i32>} : memref<2x8x16xf32, #tpu.memory_space<vmem>>, vector<1x8x16xf32>,
    %c1 = arith.constant 1 : index
    %c0_10 = arith.constant 0 : index
    %c0_11 = arith.constant 0 : index
    %21 = vector.load %arg3[%c1, %c0_10, %c0_11] : memref<2x8x16xf32, #tpu.memory_space<vmem>>, vector<1x8x16xf32>
    %22 = vector.shape_cast %21 : vector<1x8x16xf32> to vector<8x16xf32>
    %23 = vector.shape_cast %17 : vector<8x16xf32> to vector<1x8x16xf32>
    tpu.vector_store %arg3[%c1, %c0_10, %c0_11], %23 {strides = array<i32>} : memref<2x8x16xf32, #tpu.memory_space<vmem>>, vector<1x8x16xf32>,
    return
  }
}

</mosaic_0001>

<llo_original>
// kernel: tpu_custom_call.1
$region0: #{tpu_custom_call.1}
  #allocation0 [shape = 'u32[]', space=smem, size = 0x4, offset = 0x4, fixed_abs, tag = 'smem constant byte address 0x4 - core index']
  #allocation1 [shape = 'u32[144,128]{1,0:T(1,128)}', space=vmem, size = 0x12000, scoped, tag = 'internal scratch']
  %s0 = inlined_call_operand.vmem [shape: f32[8,32], index: 0, kind: input, shape index: {}]
  %s1 = inlined_call_operand.vmem [shape: f32[32,16], index: 1, kind: input, shape index: {}]
  %s2 = inlined_call_operand.vmem [shape: f32[1,16], index: 2, kind: input, shape index: {}]
  %s3 = inlined_call_operand.hbm [shape: f32[2,8,16], index: 3, kind: output, shape index: {}]
  %s4 = sld [smem:[#allocation0]]
  $region22: #{tpu_custom_call.1} parent=0
    _
  %s6 = ssub.s32 1, %s4
  %s7 = scalar_select 0, %s6, %s4
  $region1: #{tpu_custom_call.1} parent=0
    #allocation2 [shape = 'u8[8192]{0}', space=vmem, size = 0x2000, scoped, tag = 'output window, operand 0, single buffered']
    #allocation3 [shape = 's32[1]{0}', space=sflag, size = 0x4, scoped, tag = 'scoped memory for tpu_custom_call.1']
    %8 = vsyncpa [#allocation3], 0
    // Predicated region
    $region2: #{tpu_custom_call.1} parent=1 // pred_check
      _
    $region3: #{tpu_custom_call.1} parent=1 // pred_check_branch
      %10 = sbr.rel (0) target = $region5
    $region4: #{tpu_custom_call.1} parent=1 // pred_region
      _
    $region5: #{tpu_custom_call.1} parent=1 // pred_fallthru
      _
    // Predicated region
    $region6: #{tpu_custom_call.1} parent=1 // pred_check
      _
    $region7: #{tpu_custom_call.1} parent=1 // pred_check_branch
      %12 = sbr.rel (0) target = $region9
    $region8: #{tpu_custom_call.1} parent=1 // pred_region
      _
    $region9: #{tpu_custom_call.1} parent=1 // pred_fallthru
      _
    // Predicated region
    $region10: #{tpu_custom_call.1} parent=1 // pred_check
      _
    $region11: #{tpu_custom_call.1} parent=1 // pred_check_branch
      %14 = sbr.rel (0) target = $region13
    $region12: #{tpu_custom_call.1} parent=1 // pred_region
      _
    $region13: #{tpu_custom_call.1} parent=1 // pred_fallthru
      _
    %v15 = vld [vmem:[%s0] sm:$0xff]
    %v16 = vld [vmem:[%s1] sm:$0xff]
    %v17 = vld [vmem:[%s1 + $0x8] sm:$0xff]
    %v18 = vld [vmem:[%s1 + $0x10] sm:$0xff]
    %v19 = vld [vmem:[%s1 + $0x18] sm:$0xff]
    %v20 = vld [vmem:[%s2] sm:$0x1]
    %v22 = vlaneseq
    %v23 = vshrl.u32 %v22, 7
    %v24 = vsub.s32 0, %v23
    %v25 = vrot.slane %v20, %v24
    %vm27 = vcmask 261120
    %v29 = vsel %vm27, %v15, 0
    %31 = vmatprep.subr.mxu0 0.0
    %32 = vmatpush1.msra.mxu0 %v16
    %33 = vmatprep.subr.mxu0 0.0
    %34 = vmatpush1.msra.mxu0 %v17
    %35 = vmatprep.subr.mxu0 0.0
    %36 = vmatpush1.msra.mxu0 %v18
    %37 = vmatprep.subr.mxu0 0.0
    %38 = vmatpush1.msra.mxu0 %v19
    %39 = vmatprep.subr.mxu0 0.0
    %40 = vmatpush1.msra.mxu0 0.0
    %41 = vmatprep.subr.mxu0 0.0
    %42 = vmatpush1.msra.mxu0 0.0
    %43 = vmatprep.subr.mxu0 0.0
    %44 = vmatpush1.msra.mxu0 0.0
    %45 = vmatprep.subr.mxu0 0.0
    %46 = vmatpush1.msra.mxu0 0.0
    %47 = vmatprep.subr.mxu0 0.0
    %48 = vmatpush1.msra.mxu0 0.0
    %49 = vmatprep.subr.mxu0 0.0
    %50 = vmatpush1.msra.mxu0 0.0
    %51 = vmatprep.subr.mxu0 0.0
    %52 = vmatpush1.msra.mxu0 0.0
    %53 = vmatprep.subr.mxu0 0.0
    %54 = vmatpush1.msra.mxu0 0.0
    %55 = vmatprep.subr.mxu0 0.0
    %56 = vmatpush1.msra.mxu0 0.0
    %57 = vmatprep.subr.mxu0 0.0
    %58 = vmatpush1.msra.mxu0 0.0
    %59 = vmatprep.subr.mxu0 0.0
    %60 = vmatpush1.msra.mxu0 0.0
    %61 = vmatprep.subr.mxu0 0.0
    %62 = vmatpush1.msra.mxu0 0.0
    %63 = vmatprep.subr.mxu0 0.0
    %64 = vmatpush1.msra.mxu0 0.0
    %65 = vmatprep.subr.mxu0 0.0
    %66 = vmatpush1.msra.mxu0 0.0
    %67 = vmatprep.subr.mxu0 0.0
    %68 = vmatpush1.msra.mxu0 0.0
    %69 = vmatprep.subr.mxu0 0.0
    %70 = vmatpush1.msra.mxu0 0.0
    %71 = vmatprep.subr.mxu0 0.0
    %72 = vmatpush1.msra.mxu0 0.0
    %73 = vmatprep.subr.mxu0 0.0
    %74 = vmatpush1.msra.mxu0 0.0
    %75 = vmatprep.subr.mxu0 0.0
    %76 = vmatpush1.msra.mxu0 0.0
    %77 = vmatprep.subr.mxu0 0.0
    %78 = vmatpush1.msra.mxu0 0.0
    %79 = vmatprep.subr.mxu0 0.0
    %80 = vmatpush1.msra.mxu0 0.0
    %81 = vmatprep.subr.mxu0 0.0
    %82 = vmatpush1.msra.mxu0 0.0
    %83 = vmatprep.subr.mxu0 0.0
    %84 = vmatpush1.msra.mxu0 0.0
    %85 = vmatprep.subr.mxu0 0.0
    %86 = vmatpush1.msra.mxu0 0.0
    %87 = vmatprep.subr.mxu0 0.0
    %88 = vmatpush1.msra.mxu0 0.0
    %89 = vmatprep.subr.mxu0 0.0
    %90 = vmatpush1.msra.mxu0 0.0
    %91 = vmatprep.subr.mxu0 0.0
    %92 = vmatpush1.msra.mxu0 0.0
    %93 = vmatprep.subr.mxu0 0.0
    %94 = vmatpush1.msra.mxu0 0.0
    %95 = vmatprep.mubr.f32.mxu0 0.0
    %96 = vmatmul.mubr.f32.gmra.mrb[0].mxu0 %v29
    %v97 = vpop.f32.mrb[0].mxu0
    %v98 = vadd.f32 %v25, %v97
    %v99 = vpop.f32.mrb[0].mxu0
    %100 = vdwg.mxu0
    %vm101 = vcmask 130048
    %v102 = vsel %vm101, %v98, -inf
    %103 = vmax.xlane.f32.xlu0 %v102
    %v104 = vpop.xlane.xlu0 %103
    %v105 = vsub.f32 %v98, %v104
    %v106 = vmul.f32 %v105, 1.442695
    %v107 = vpow.pop %v106
    %v108 = vsel %vm101, %v107, 0.0
    %109 = vadd.xlane.f32.xlu0 %v108
    %v110 = vpop.xlane.xlu0 %109
    %v111 = vlog2.pop %v110
    %v112 = vmul.f32 %v111, 0.6931472
    %v113 = vsub.f32 %v105, %v112
    %v114 = vrcp.pop %v110
    %v115 = vmul.f32 %v107, %v114
    %116 = vst.msk [vmem:[#allocation2] sm:$0xff] %vm101, %v113
    %s117 = scalar_lea.vmem [#allocation2], 8
    %118 = vst.msk [vmem:[%s117] sm:$0xff] %vm101, %v115
    // Predicated region
    $region14: #{tpu_custom_call.1} parent=1 // pred_check
      _
    $region15: #{tpu_custom_call.1} parent=1 // pred_check_branch
      %120 = sbr.rel (0) target = $region17
    $region16: #{tpu_custom_call.1} parent=1 // pred_region
      %s122 = ssub.s32 256, 256
      %123 = vsyncadd [#allocation3], %s122
      %s124 = sshll.u32 [#allocation2], 4
      %s125 = int_to_ptr.vmem [resolvable:$true] %s124
      %130 = dma.vmem_to_hbm [thread:$0]  %s125, 256, %s3, [#allocation3], 128, 128, 8
    $region17: #{tpu_custom_call.1} parent=1 // pred_fallthru
      _
    // Predicated region
    $region18: #{tpu_custom_call.1} parent=1 // pred_check
      _
    $region19: #{tpu_custom_call.1} parent=1 // pred_check_branch
      %132 = sbr.rel (0) target = $region21
    $region20: #{tpu_custom_call.1} parent=1 // pred_region
      %133 = dma.done [#allocation3], 256
    $region21: #{tpu_custom_call.1} parent=1 // pred_fallthru
      _
    %134 = vsyncpa [#allocation3], 1

</llo_original>
